<compile_context>
chip_gen: v5e
topology: v5e:2x2
jax: 0.10.0
libtpu: 0.0.40
codegen_flags: <defaults>
</compile_context>

<pallas_src>
import functools

import jax
import jax.numpy as jnp
from jax.experimental import pallas as pl
from jax.experimental.pallas import tpu as pltpu

LANE = 128
SUBLANE = 8


def _round_up(x, m):
    return ((x + m - 1) // m) * m


def actor_kernel(x_ref, w1_ref, b1_ref, w2_ref, b2_ref, w3_ref, b3_ref, out_ref):
    # linear1 + ReLU (MXU in input dtype, f32 accumulate, f32 elementwise)
    h1 = jnp.dot(x_ref[...], w1_ref[...], preferred_element_type=jnp.float32)
    h1 = jnp.maximum(h1 + b1_ref[...], 0.0)
    # linear2 + ReLU
    h2 = jnp.dot(h1.astype(w2_ref.dtype), w2_ref[...],
                 preferred_element_type=jnp.float32)
    h2 = jnp.maximum(h2 + b2_ref[...], 0.0)
    # linear3 + tanh
    h3 = jnp.dot(h2.astype(w3_ref.dtype), w3_ref[...],
                 preferred_element_type=jnp.float32)
    out_ref[...] = jnp.tanh(h3 + b3_ref[...]).astype(out_ref.dtype)


@functools.partial(jax.jit, static_argnames=("block_b", "mxu_dtype"))
def actor_forward(x, params, *, block_b=2048, mxu_dtype=jnp.float32):
    """Fused Actor forward pass. x: (B, state_size) f32 -> (B, action_size) f32."""
    w1, b1, w2, b2, w3, b3 = params
    B, S = x.shape
    H = w1.shape[1]
    A = w3.shape[1]

    # Lane-dense padding: K of the first matmul and the output feature dim -> x128.
    Sp = _round_up(S, LANE)
    Ap = _round_up(A, LANE)

    # Batch tile (multiple of 8 sublanes); pad batch up to a whole number of tiles.
    tb = min(block_b, _round_up(B, SUBLANE))
    Bp = _round_up(B, tb)
    nb = Bp // tb

    # Zero-pad (zeros contribute nothing through the matmuls; extra outputs sliced off).
    x_p = jnp.pad(x, ((0, Bp - B), (0, Sp - S))).astype(mxu_dtype)
    w1_p = jnp.pad(w1, ((0, Sp - S), (0, 0))).astype(mxu_dtype)
    w2_p = w2.astype(mxu_dtype)
    w3_p = jnp.pad(w3, ((0, 0), (0, Ap - A))).astype(mxu_dtype)
    b1_p = b1.astype(jnp.float32)
    b2_p = b2.astype(jnp.float32)
    b3_p = jnp.pad(b3, ((0, 0), (0, Ap - A))).astype(jnp.float32)

    resident = lambda i: (0, 0)  # weights/biases stay in VMEM across batch tiles

    out_p = pl.pallas_call(
        actor_kernel,
        out_shape=jax.ShapeDtypeStruct((Bp, Ap), jnp.float32),
        grid=(nb,),
        in_specs=[
            pl.BlockSpec((tb, Sp), lambda i: (i, 0)),   # x tile (pipelined)
            pl.BlockSpec((Sp, H), resident),            # w1
            pl.BlockSpec((1, H), resident),             # b1
            pl.BlockSpec((H, H), resident),             # w2
            pl.BlockSpec((1, H), resident),             # b2
            pl.BlockSpec((H, Ap), resident),            # w3
            pl.BlockSpec((1, Ap), resident),            # b3
        ],
        out_specs=pl.BlockSpec((tb, Ap), lambda i: (i, 0)),  # lane-dense output tile
        compiler_params=pltpu.CompilerParams(
            dimension_semantics=("parallel",),          # v7x: shard batch over 2 TCs
        ),
    )(x_p, w1_p, b1_p, w2_p, b2_p, w3_p, b3_p)

    return out_p[:B, :A]


def init_params(key, state_size, action_size, hidden=128):
    # Deterministic init mimicking nn.Linear's uniform(-1/sqrt(fan_in), 1/sqrt(fan_in)).
    keys = jax.random.split(key, 6)

    def lin(kw, kb, fan_in, fan_out):
        bound = 1.0 / jnp.sqrt(jnp.float32(fan_in))
        w = jax.random.uniform(kw, (fan_in, fan_out), jnp.float32, -bound, bound)
        b = jax.random.uniform(kb, (1, fan_out), jnp.float32, -bound, bound)
        return w, b

    w1, b1 = lin(keys[0], keys[1], state_size, hidden)
    w2, b2 = lin(keys[2], keys[3], hidden, hidden)
    w3, b3 = lin(keys[4], keys[5], hidden, action_size)
    return (w1, b1, w2, b2, w3, b3)


def actor_reference(x, params):
    w1, b1, w2, b2, w3, b3 = params
    h = jnp.maximum(x @ w1 + b1, 0.0)
    h = jnp.maximum(h @ w2 + b2, 0.0)
    return jnp.tanh(h @ w3 + b3)


if __name__ == "__main__":
    key = jax.random.PRNGKey(0)
    k_x, k_p = jax.random.split(key)

    batch, state_size, action_size = 8, 32, 8
    x = jax.random.normal(k_x, (batch, state_size), dtype=jnp.float32)
    params = init_params(k_p, state_size, action_size)

    ref = actor_reference(x, params)

    # Exact-semantics path (f32 MXU inputs): must match the PyTorch-style reference.
    out_f32 = jax.block_until_ready(actor_forward(x, params, mxu_dtype=jnp.float32))
    assert out_f32.shape == (batch, action_size)
    assert jnp.allclose(out_f32, ref, atol=1e-5, rtol=1e-5)

    # Fast path for v6e/v7x (bf16 MXU inputs, f32 accumulate/elementwise): looser check.
    out_bf16 = jax.block_until_ready(actor_forward(x, params, mxu_dtype=jnp.bfloat16))
    assert out_bf16.shape == (batch, action_size)
    assert jnp.allclose(out_bf16, ref, atol=5e-2, rtol=5e-2)

    print("KERNEL_OK")
</pallas_src>

<mosaic_0001>
module attributes {stable_mosaic.version = 11 : i64} {
  func.func @actor_kernel(%arg0: i32, %arg1: memref<8x128xf32, #tpu.memory_space<vmem>>, %arg2: memref<128x128xf32, #tpu.memory_space<vmem>>, %arg3: memref<1x128xf32, #tpu.memory_space<vmem>>, %arg4: memref<128x128xf32, #tpu.memory_space<vmem>>, %arg5: memref<1x128xf32, #tpu.memory_space<vmem>>, %arg6: memref<128x128xf32, #tpu.memory_space<vmem>>, %arg7: memref<1x128xf32, #tpu.memory_space<vmem>>, %arg8: memref<8x128xf32, #tpu.memory_space<vmem>>) attributes {dimension_semantics = [#tpu.dimension_semantics<parallel>], iteration_bounds = array<i64: 1>, scalar_prefetch = 0 : i64, scratch_operands = 0 : i64, tpu.core_type = #tpu.core_type<tc>, window_params = [{transform_indices = @transform_0, window_bounds = array<i64: 8, 128>}, {pipeline_mode = #tpu.pipeline_mode<synchronous>, transform_indices = @transform_1, window_bounds = array<i64: 128, 128>}, {pipeline_mode = #tpu.pipeline_mode<synchronous>, transform_indices = @transform_2, window_bounds = array<i64: 1, 128>}, {pipeline_mode = #tpu.pipeline_mode<synchronous>, transform_indices = @transform_3, window_bounds = array<i64: 128, 128>}, {pipeline_mode = #tpu.pipeline_mode<synchronous>, transform_indices = @transform_4, window_bounds = array<i64: 1, 128>}, {pipeline_mode = #tpu.pipeline_mode<synchronous>, transform_indices = @transform_5, window_bounds = array<i64: 128, 128>}, {pipeline_mode = #tpu.pipeline_mode<synchronous>, transform_indices = @transform_6, window_bounds = array<i64: 1, 128>}, {transform_indices = @transform_7, window_bounds = array<i64: 8, 128>}]} {
    %c0 = arith.constant 0 : index
    %c0_0 = arith.constant 0 : index
    %0 = vector.load %arg1[%c0, %c0_0] : memref<8x128xf32, #tpu.memory_space<vmem>>, vector<8x128xf32>
    %c0_1 = arith.constant 0 : index
    %c0_2 = arith.constant 0 : index
    %1 = vector.load %arg2[%c0_1, %c0_2] : memref<128x128xf32, #tpu.memory_space<vmem>>, vector<128x128xf32>
    %cst = arith.constant dense<0.000000e+00> : vector<8x128xf32>
    %2 = tpu.matmul %0, %1, %cst {dimension_numbers = #tpu.dot_dimension_numbers<[1], [0], [0], [1], [0, 0, 1, 1], [], []>} : vector<8x128xf32>, vector<128x128xf32>, vector<8x128xf32> -> vector<8x128xf32>
    %c0_3 = arith.constant 0 : index
    %c0_4 = arith.constant 0 : index
    %3 = vector.load %arg3[%c0_3, %c0_4] : memref<1x128xf32, #tpu.memory_space<vmem>>, vector<1x128xf32>
    %4 = vector.broadcast %3 : vector<1x128xf32> to vector<8x128xf32>
    %5 = arith.addf %2, %4 : vector<8x128xf32>
    %cst_5 = arith.constant 0.000000e+00 : f32
    %6 = vector.broadcast %cst_5 : f32 to vector<8x128xf32>
    %7 = arith.maximumf %5, %6 : vector<8x128xf32>
    %c0_6 = arith.constant 0 : index
    %c0_7 = arith.constant 0 : index
    %8 = vector.load %arg4[%c0_6, %c0_7] : memref<128x128xf32, #tpu.memory_space<vmem>>, vector<128x128xf32>
    %cst_8 = arith.constant dense<0.000000e+00> : vector<8x128xf32>
    %9 = tpu.matmul %7, %8, %cst_8 {dimension_numbers = #tpu.dot_dimension_numbers<[1], [0], [0], [1], [0, 0, 1, 1], [], []>} : vector<8x128xf32>, vector<128x128xf32>, vector<8x128xf32> -> vector<8x128xf32>
    %c0_9 = arith.constant 0 : index
    %c0_10 = arith.constant 0 : index
    %10 = vector.load %arg5[%c0_9, %c0_10] : memref<1x128xf32, #tpu.memory_space<vmem>>, vector<1x128xf32>
    %11 = vector.broadcast %10 : vector<1x128xf32> to vector<8x128xf32>
    %12 = arith.addf %9, %11 : vector<8x128xf32>
    %cst_11 = arith.constant 0.000000e+00 : f32
    %13 = vector.broadcast %cst_11 : f32 to vector<8x128xf32>
    %14 = arith.maximumf %12, %13 : vector<8x128xf32>
    %c0_12 = arith.constant 0 : index
    %c0_13 = arith.constant 0 : index
    %15 = vector.load %arg6[%c0_12, %c0_13] : memref<128x128xf32, #tpu.memory_space<vmem>>, vector<128x128xf32>
    %cst_14 = arith.constant dense<0.000000e+00> : vector<8x128xf32>
    %16 = tpu.matmul %14, %15, %cst_14 {dimension_numbers = #tpu.dot_dimension_numbers<[1], [0], [0], [1], [0, 0, 1, 1], [], []>} : vector<8x128xf32>, vector<128x128xf32>, vector<8x128xf32> -> vector<8x128xf32>
    %c0_15 = arith.constant 0 : index
    %c0_16 = arith.constant 0 : index
    %17 = vector.load %arg7[%c0_15, %c0_16] : memref<1x128xf32, #tpu.memory_space<vmem>>, vector<1x128xf32>
    %18 = vector.broadcast %17 : vector<1x128xf32> to vector<8x128xf32>
    %19 = arith.addf %16, %18 : vector<8x128xf32>
    %20 = math.tanh %19 : vector<8x128xf32>
    %c0_17 = arith.constant 0 : index
    %c0_18 = arith.constant 0 : index
    %21 = vector.load %arg8[%c0_17, %c0_18] : memref<8x128xf32, #tpu.memory_space<vmem>>, vector<8x128xf32>
    tpu.vector_store %arg8[%c0_17, %c0_18], %20 {strides = array<i32>} : memref<8x128xf32, #tpu.memory_space<vmem>>, vector<8x128xf32>,
    return
  }
  func.func @transform_0(%arg0: i32) -> (i32, i32) {
    %c0_i32 = arith.constant 0 : i32
    %c0_i32_0 = arith.constant 0 : i32
    return %arg0, %c0_i32 : i32, i32
  }
  func.func @transform_1(%arg0: i32) -> (i32, i32) {
    %c0_i32 = arith.constant 0 : i32
    %c0_i32_0 = arith.constant 0 : i32
    %c0_i32_1 = arith.constant 0 : i32
    return %c0_i32, %c0_i32_0 : i32, i32
  }
  func.func @transform_2(%arg0: i32) -> (i32, i32) {
    %c0_i32 = arith.constant 0 : i32
    %c0_i32_0 = arith.constant 0 : i32
    %c0_i32_1 = arith.constant 0 : i32
    return %c0_i32, %c0_i32_0 : i32, i32
  }
  func.func @transform_3(%arg0: i32) -> (i32, i32) {
    %c0_i32 = arith.constant 0 : i32
    %c0_i32_0 = arith.constant 0 : i32
    %c0_i32_1 = arith.constant 0 : i32
    return %c0_i32, %c0_i32_0 : i32, i32
  }
  func.func @transform_4(%arg0: i32) -> (i32, i32) {
    %c0_i32 = arith.constant 0 : i32
    %c0_i32_0 = arith.constant 0 : i32
    %c0_i32_1 = arith.constant 0 : i32
    return %c0_i32, %c0_i32_0 : i32, i32
  }
  func.func @transform_5(%arg0: i32) -> (i32, i32) {
    %c0_i32 = arith.constant 0 : i32
    %c0_i32_0 = arith.constant 0 : i32
    %c0_i32_1 = arith.constant 0 : i32
    return %c0_i32, %c0_i32_0 : i32, i32
  }
  func.func @transform_6(%arg0: i32) -> (i32, i32) {
    %c0_i32 = arith.constant 0 : i32
    %c0_i32_0 = arith.constant 0 : i32
    %c0_i32_1 = arith.constant 0 : i32
    return %c0_i32, %c0_i32_0 : i32, i32
  }
  func.func @transform_7(%arg0: i32) -> (i32, i32) {
    %c0_i32 = arith.constant 0 : i32
    %c0_i32_0 = arith.constant 0 : i32
    return %arg0, %c0_i32 : i32, i32
  }
}

</mosaic_0001>

<llo_original>
// kernel: actor_forward.1
$region0: #{actor_forward.1}
  #allocation0 [shape = 'u32[]', space=smem, size = 0x4, offset = 0x4, fixed_abs, tag = 'smem constant byte address 0x4 - core index']
  #allocation1 [shape = 'u32[72,128]{1,0:T(1,128)}', space=vmem, size = 0x9000, scoped, tag = 'internal scratch']
  %s0 = inlined_call_operand.vmem [shape: f32[8,128], index: 0, kind: input, shape index: {}]
  %s1 = inlined_call_operand.vmem [shape: f32[128,128], index: 1, kind: input, shape index: {}]
  %s2 = inlined_call_operand.vmem [shape: f32[1,128], index: 2, kind: input, shape index: {}]
  %s3 = inlined_call_operand.vmem [shape: f32[128,128], index: 3, kind: input, shape index: {}]
  %s4 = inlined_call_operand.vmem [shape: f32[1,128], index: 4, kind: input, shape index: {}]
  %s5 = inlined_call_operand.vmem [shape: f32[128,128], index: 5, kind: input, shape index: {}]
  %s6 = inlined_call_operand.vmem [shape: f32[1,128], index: 6, kind: input, shape index: {}]
  %s7 = inlined_call_operand.hbm [shape: f32[8,128], index: 7, kind: output, shape index: {}]
  %s8 = sld [smem:[#allocation0]]
  $region38: #{actor_forward.1} parent=0
    _
  %s10 = ssub.s32 1, %s8
  %s11 = scalar_select 0, %s10, %s8
  $region1: #{actor_forward.1} parent=0
    #allocation2 [shape = 'u8[4096]{0}', space=vmem, size = 0x1000, scoped, tag = 'output window, operand 0, single buffered']
    #allocation3 [shape = 's32[1]{0}', space=sflag, size = 0x4, scoped, tag = 'scoped memory for actor_forward.1']
    %12 = vsyncpa [#allocation3], 0
    // Predicated region
    $region2: #{actor_forward.1} parent=1 // pred_check
      _
    $region3: #{actor_forward.1} parent=1 // pred_check_branch
      %14 = sbr.rel (0) target = $region5
    $region4: #{actor_forward.1} parent=1 // pred_region
      _
    $region5: #{actor_forward.1} parent=1 // pred_fallthru
      _
    // Predicated region
    $region6: #{actor_forward.1} parent=1 // pred_check
      _
    $region7: #{actor_forward.1} parent=1 // pred_check_branch
      %16 = sbr.rel (0) target = $region9
    $region8: #{actor_forward.1} parent=1 // pred_region
      _
    $region9: #{actor_forward.1} parent=1 // pred_fallthru
      _
    // Predicated region
    $region10: #{actor_forward.1} parent=1 // pred_check
      _
    $region11: #{actor_forward.1} parent=1 // pred_check_branch
      %18 = sbr.rel (0) target = $region13
    $region12: #{actor_forward.1} parent=1 // pred_region
      _
    $region13: #{actor_forward.1} parent=1 // pred_fallthru
      _
    // Predicated region
    $region14: #{actor_forward.1} parent=1 // pred_check
      _
    $region15: #{actor_forward.1} parent=1 // pred_check_branch
      %20 = sbr.rel (0) target = $region17
    $region16: #{actor_forward.1} parent=1 // pred_region
      _
    $region17: #{actor_forward.1} parent=1 // pred_fallthru
      _
    // Predicated region
    $region18: #{actor_forward.1} parent=1 // pred_check
      _
    $region19: #{actor_forward.1} parent=1 // pred_check_branch
      %22 = sbr.rel (0) target = $region21
    $region20: #{actor_forward.1} parent=1 // pred_region
      _
    $region21: #{actor_forward.1} parent=1 // pred_fallthru
      _
    // Predicated region
    $region22: #{actor_forward.1} parent=1 // pred_check
      _
    $region23: #{actor_forward.1} parent=1 // pred_check_branch
      %24 = sbr.rel (0) target = $region25
    $region24: #{actor_forward.1} parent=1 // pred_region
      _
    $region25: #{actor_forward.1} parent=1 // pred_fallthru
      _
    // Predicated region
    $region26: #{actor_forward.1} parent=1 // pred_check
      _
    $region27: #{actor_forward.1} parent=1 // pred_check_branch
      %26 = sbr.rel (0) target = $region29
    $region28: #{actor_forward.1} parent=1 // pred_region
      _
    $region29: #{actor_forward.1} parent=1 // pred_fallthru
      _
    %v27 = vld [vmem:[%s0] sm:$0xff]
    %v28 = vld [vmem:[%s1] sm:$0xff]
    %v29 = vld [vmem:[%s1 + $0x8] sm:$0xff]
    %v30 = vld [vmem:[%s1 + $0x10] sm:$0xff]
    %v31 = vld [vmem:[%s1 + $0x18] sm:$0xff]
    %v32 = vld [vmem:[%s1 + $0x20] sm:$0xff]
    %v33 = vld [vmem:[%s1 + $0x28] sm:$0xff]
    %v34 = vld [vmem:[%s1 + $0x30] sm:$0xff]
    %v35 = vld [vmem:[%s1 + $0x38] sm:$0xff]
    %v36 = vld [vmem:[%s1 + $0x40] sm:$0xff]
    %v37 = vld [vmem:[%s1 + $0x48] sm:$0xff]
    %v38 = vld [vmem:[%s1 + $0x50] sm:$0xff]
    %v39 = vld [vmem:[%s1 + $0x58] sm:$0xff]
    %v40 = vld [vmem:[%s1 + $0x60] sm:$0xff]
    %v41 = vld [vmem:[%s1 + $0x68] sm:$0xff]
    %v42 = vld [vmem:[%s1 + $0x70] sm:$0xff]
    %v43 = vld [vmem:[%s1 + $0x78] sm:$0xff]
    %v44 = vld [vmem:[%s2] sm:$0x1]
    %v46 = vperm.slane %v44, 0
    %48 = vmatpush.msra.mxu0 %v43
    %49 = vmatpush.msra.mxu0 %v42
    %50 = vmatpush.msra.mxu0 %v41
    %51 = vmatpush.msra.mxu0 %v40
    %52 = vmatpush.msra.mxu0 %v39
    %53 = vmatpush.msra.mxu0 %v38
    %54 = vmatpush.msra.mxu0 %v37
    %55 = vmatpush.msra.mxu0 %v36
    %56 = vmatpush.msra.mxu0 %v35
    %57 = vmatpush.msra.mxu0 %v34
    %58 = vmatpush.msra.mxu0 %v33
    %59 = vmatpush.msra.mxu0 %v32
    %60 = vmatpush.msra.mxu0 %v31
    %61 = vmatpush.msra.mxu0 %v30
    %62 = vmatpush.msra.mxu0 %v29
    %63 = vmatpush.msra.mxu0 %v28
    %64 = vmatmul.f32.gmra.mxu0 %v27
    %v65 = vpop.f32.mrf.mxu0
    %v66 = vadd.f32 %v46, %v65
    %67 = vdwg.mxu0
    %v68 = vmax.f32 %v66, 0.0
    %v69 = vld [vmem:[%s3] sm:$0xff]
    %v70 = vld [vmem:[%s3 + $0x8] sm:$0xff]
    %v71 = vld [vmem:[%s3 + $0x10] sm:$0xff]
    %v72 = vld [vmem:[%s3 + $0x18] sm:$0xff]
    %v73 = vld [vmem:[%s3 + $0x20] sm:$0xff]
    %v74 = vld [vmem:[%s3 + $0x28] sm:$0xff]
    %v75 = vld [vmem:[%s3 + $0x30] sm:$0xff]
    %v76 = vld [vmem:[%s3 + $0x38] sm:$0xff]
    %v77 = vld [vmem:[%s3 + $0x40] sm:$0xff]
    %v78 = vld [vmem:[%s3 + $0x48] sm:$0xff]
    %v79 = vld [vmem:[%s3 + $0x50] sm:$0xff]
    %v80 = vld [vmem:[%s3 + $0x58] sm:$0xff]
    %v81 = vld [vmem:[%s3 + $0x60] sm:$0xff]
    %v82 = vld [vmem:[%s3 + $0x68] sm:$0xff]
    %v83 = vld [vmem:[%s3 + $0x70] sm:$0xff]
    %v84 = vld [vmem:[%s3 + $0x78] sm:$0xff]
    %v85 = vld [vmem:[%s4] sm:$0x1]
    %v87 = vperm.slane %v85, 0
    %89 = vmatpush.msra.mxu0 %v84
    %90 = vmatpush.msra.mxu0 %v83
    %91 = vmatpush.msra.mxu0 %v82
    %92 = vmatpush.msra.mxu0 %v81
    %93 = vmatpush.msra.mxu0 %v80
    %94 = vmatpush.msra.mxu0 %v79
    %95 = vmatpush.msra.mxu0 %v78
    %96 = vmatpush.msra.mxu0 %v77
    %97 = vmatpush.msra.mxu0 %v76
    %98 = vmatpush.msra.mxu0 %v75
    %99 = vmatpush.msra.mxu0 %v74
    %100 = vmatpush.msra.mxu0 %v73
    %101 = vmatpush.msra.mxu0 %v72
    %102 = vmatpush.msra.mxu0 %v71
    %103 = vmatpush.msra.mxu0 %v70
    %104 = vmatpush.msra.mxu0 %v69
    %105 = vmatmul.f32.gmra.mxu0 %v68
    %v106 = vpop.f32.mrf.mxu0
    %v107 = vadd.f32 %v87, %v106
    %108 = vdwg.mxu0
    %v109 = vmax.f32 %v107, 0.0
    %v110 = vld [vmem:[%s5] sm:$0xff]
    %v111 = vld [vmem:[%s5 + $0x8] sm:$0xff]
    %v112 = vld [vmem:[%s5 + $0x10] sm:$0xff]
    %v113 = vld [vmem:[%s5 + $0x18] sm:$0xff]
    %v114 = vld [vmem:[%s5 + $0x20] sm:$0xff]
    %v115 = vld [vmem:[%s5 + $0x28] sm:$0xff]
    %v116 = vld [vmem:[%s5 + $0x30] sm:$0xff]
    %v117 = vld [vmem:[%s5 + $0x38] sm:$0xff]
    %v118 = vld [vmem:[%s5 + $0x40] sm:$0xff]
    %v119 = vld [vmem:[%s5 + $0x48] sm:$0xff]
    %v120 = vld [vmem:[%s5 + $0x50] sm:$0xff]
    %v121 = vld [vmem:[%s5 + $0x58] sm:$0xff]
    %v122 = vld [vmem:[%s5 + $0x60] sm:$0xff]
    %v123 = vld [vmem:[%s5 + $0x68] sm:$0xff]
    %v124 = vld [vmem:[%s5 + $0x70] sm:$0xff]
    %v125 = vld [vmem:[%s5 + $0x78] sm:$0xff]
    %v126 = vld [vmem:[%s6] sm:$0x1]
    %v128 = vperm.slane %v126, 0
    %130 = vmatpush.msra.mxu0 %v125
    %131 = vmatpush.msra.mxu0 %v124
    %132 = vmatpush.msra.mxu0 %v123
    %133 = vmatpush.msra.mxu0 %v122
    %134 = vmatpush.msra.mxu0 %v121
    %135 = vmatpush.msra.mxu0 %v120
    %136 = vmatpush.msra.mxu0 %v119
    %137 = vmatpush.msra.mxu0 %v118
    %138 = vmatpush.msra.mxu0 %v117
    %139 = vmatpush.msra.mxu0 %v116
    %140 = vmatpush.msra.mxu0 %v115
    %141 = vmatpush.msra.mxu0 %v114
    %142 = vmatpush.msra.mxu0 %v113
    %143 = vmatpush.msra.mxu0 %v112
    %144 = vmatpush.msra.mxu0 %v111
    %145 = vmatpush.msra.mxu0 %v110
    %146 = vmatmul.f32.gmra.mxu0 %v109
    %v147 = vpop.f32.mrf.mxu0
    %v148 = vadd.f32 %v128, %v147
    %149 = vdwg.mxu0
    %v150 = vtanh.pop %v148
    %151 = vst [vmem:[#allocation2] sm:$0xff] %v150
    // Predicated region
    $region30: #{actor_forward.1} parent=1 // pred_check
      _
    $region31: #{actor_forward.1} parent=1 // pred_check_branch
      %153 = sbr.rel (0) target = $region33
    $region32: #{actor_forward.1} parent=1 // pred_region
      %155 = vsyncadd [#allocation3], 0
      %s157 = sshll.u32 [#allocation2], 4
      %s158 = int_to_ptr.vmem [resolvable:$true] %s157
      %s159 = sshll.u32 %s7, 4
      %s160 = int_to_ptr.hbm [resolvable:$true] %s159
      %162 = dma.vmem_to_hbm [thread:$0]  %s158, 128, %s160, [#allocation3]
    $region33: #{actor_forward.1} parent=1 // pred_fallthru
      _
    // Predicated region
    $region34: #{actor_forward.1} parent=1 // pred_check
      _
    $region35: #{actor_forward.1} parent=1 // pred_check_branch
      %164 = sbr.rel (0) target = $region37
    $region36: #{actor_forward.1} parent=1 // pred_region
      %166 = dma.done [#allocation3], 128
    $region37: #{actor_forward.1} parent=1 // pred_fallthru
      _
    %167 = vsyncpa [#allocation3], 1

</llo_original>
